<compile_context>
chip_gen: v7x
topology: tpu7x:2x2x1
jax: 0.10.0
libtpu: 0.0.40
codegen_flags: <defaults>
</compile_context>

<pallas_src>
import functools
import math

import jax
import jax.numpy as jnp
from jax.experimental import pallas as pl
from jax.experimental.pallas import tpu as pltpu

_LANES = 128
_SUBLANES = 8


@functools.lru_cache(maxsize=None)
def _chip_profile():
    """Returns (block_bytes, vmem_limit_bytes_or_None, upcast_to_f32) for the local chip."""
    try:
        kind = jax.devices()[0].device_kind.lower()
    except Exception:  # be safe if device query is unavailable
        kind = ""
    if "v7" in kind:
        # ~3.2 TB/s HBM per TC: 8 MiB blocks keep the ~0.35 us per-step overhead <10%.
        # 4 buffers x 8 MiB > 32 MiB default scoped VMEM, so raise the limit (64 MiB phys).
        return 8 * 1024 * 1024, 40 * 1024 * 1024, False
    if "v6" in kind:
        # 4 MiB blocks: 16 MiB double-buffered, inside the 32 MiB default scoped VMEM.
        return 4 * 1024 * 1024, None, False
    # v5e (16 MiB default scoped VMEM, no bf16 VALU) and anything unrecognized.
    return 2 * 1024 * 1024, None, True


def _scale_kernel(scale_ref, x_ref, o_ref, *, upcast_to_f32: bool):
    # scale_ref: SMEM f32[1]; x_ref / o_ref: VMEM (tile_rows, lanes) tiles.
    x = x_ref[...]
    s = scale_ref[0]
    if upcast_to_f32 and x.dtype != jnp.float32:
        # v5e VPU has no bf16 path: compute in f32 and cast back.
        o_ref[...] = (x.astype(jnp.float32) * s).astype(o_ref.dtype)
    else:
        # Native multiply (bf16-native on v6e/v7x; plain f32 everywhere).
        o_ref[...] = x * s.astype(x.dtype)


def _scale_slab(slab: jax.Array, scale_arr: jax.Array, *, donate_x: bool) -> jax.Array:
    rows, lanes = slab.shape
    block_bytes, vmem_limit, upcast = _chip_profile()
    itemsize = jnp.dtype(slab.dtype).itemsize

    # Largest sublane-aligned tile within the per-chip block budget; a single
    # full-extent block when the slab already fits (no forced multi-step split:
    # on 1-TC v5e/v6e extra grid steps are pure per-step overhead).
    max_tile_rows = max(
        _SUBLANES, (block_bytes // (lanes * itemsize)) // _SUBLANES * _SUBLANES
    )
    tile_rows = rows if rows <= max_tile_rows else max_tile_rows
    grid = (pl.cdiv(rows, tile_rows),)  # cdiv: the tail block is masked, never dropped
    nbytes = rows * lanes * itemsize

    # Aliasing the input HBM buffer is only a win when the caller actually donates x
    # (jax.jit(..., donate_argnums=...)); otherwise XLA inserts a defensive full-HBM
    # copy of the slab, so it is opt-in rather than unconditional.
    aliases = {1: 0} if donate_x else {}

    # TODO(synk): on v7x, sweep pltpu.CORE_PARALLEL on the grid axis (with >=2 steps,
    # per-TC chunks >= a few hundred KiB) to stream from both TensorCores; plain
    # "parallel" does not shard across cores and is kept for safety here.
    return pl.pallas_call(
        functools.partial(_scale_kernel, upcast_to_f32=upcast),
        out_shape=jax.ShapeDtypeStruct((rows, lanes), slab.dtype),
        grid_spec=pltpu.PrefetchScalarGridSpec(
            num_scalar_prefetch=0,
            grid=grid,
            in_specs=[
                pl.BlockSpec(memory_space=pltpu.MemorySpace.SMEM),   # scale scalar
                pl.BlockSpec((tile_rows, lanes), lambda i: (i, 0)),  # x tile
            ],
            out_specs=pl.BlockSpec((tile_rows, lanes), lambda i: (i, 0)),
        ),
        compiler_params=pltpu.CompilerParams(
            dimension_semantics=("parallel",),
            vmem_limit_bytes=vmem_limit,
        ),
        input_output_aliases=aliases,
        cost_estimate=pl.CostEstimate(
            flops=rows * lanes,
            transcendentals=0,
            bytes_accessed=2 * nbytes,
        ),
    )(scale_arr, slab)


def _pick_lanes(n: int) -> int:
    """Widest lane-dense row width (multiple of 128) that divides n, else 0."""
    for lanes in (1024, 512, 256, _LANES):
        if n % lanes == 0:
            return lanes
    return 0


def diffusion_inf(x: jax.Array, beta, *, donate_x: bool = False) -> jax.Array:
    """Pallas TPU implementation of DiffusionInf.forward: sqrt(1 - beta) * x."""
    x = jnp.asarray(x)
    if not jnp.issubdtype(x.dtype, jnp.floating):
        raise TypeError(
            f"diffusion_inf expects a floating-point input, got {x.dtype}: an integer "
            "input would silently round instead of promoting like the PyTorch reference."
        )

    # Runtime scalar in SMEM: one compiled kernel serves every beta / diffusion step.
    scale_arr = jnp.sqrt(1.0 - jnp.asarray(beta, dtype=jnp.float32)).reshape(1)

    n = x.size
    orig_shape = x.shape
    if n == 0:
        return x

    lanes = _pick_lanes(n)
    if lanes:
        # Fast path: zero-copy reshape to a lane-dense slab; no pad, no slice.
        slab = x.reshape(n // lanes, lanes)
        return _scale_slab(slab, scale_arr, donate_x=donate_x).reshape(orig_shape)

    # Ragged fallback: kernel on the 128-aligned prefix, plain jnp on the (<128-element)
    # tail -> traffic stays ~2N bytes (no full-array pad / slice passes).
    flat = x.reshape(-1)
    n_prefix = (n // _LANES) * _LANES
    tail = (flat[n_prefix:].astype(jnp.float32) * scale_arr[0]).astype(x.dtype)
    if n_prefix == 0:
        return tail.reshape(orig_shape)
    prefix = _scale_slab(
        flat[:n_prefix].reshape(n_prefix // _LANES, _LANES), scale_arr, donate_x=donate_x
    ).reshape(-1)
    return jnp.concatenate([prefix, tail]).reshape(orig_shape)


if __name__ == "__main__":
    beta = 0.1
    ref_scale = math.sqrt(1.0 - beta)

    # Small NCHW input consistent with the recurrent-layer usage (fast path, 1024-lane slab).
    x = jax.random.normal(jax.random.PRNGKey(0), (2, 4, 16, 16), dtype=jnp.float32)
    y = jax.block_until_ready(diffusion_inf(x, beta))
    assert y.shape == x.shape and y.dtype == x.dtype
    assert jnp.allclose(y, ref_scale * x, atol=1e-6, rtol=1e-6)

    # Ragged size: exercises the aligned-prefix kernel + tiny jnp tail fallback.
    x2 = jax.random.normal(jax.random.PRNGKey(1), (3, 130), dtype=jnp.float32)
    y2 = jax.block_until_ready(diffusion_inf(x2, beta))
    assert y2.shape == x2.shape and y2.dtype == x2.dtype
    assert jnp.allclose(y2, ref_scale * x2, atol=1e-6, rtol=1e-6)

    print("KERNEL_OK")
</pallas_src>

<mosaic_0001>
module attributes {stable_mosaic.version = 11 : i64} {
  func.func @_scale_kernel(%arg0: i32, %arg1: memref<1xf32, #tpu.memory_space<smem>>, %arg2: memref<2x1024xf32, #tpu.memory_space<vmem>>, %arg3: memref<2x1024xf32, #tpu.memory_space<vmem>>) attributes {dimension_semantics = [#tpu.dimension_semantics<parallel>], iteration_bounds = array<i64: 1>, scalar_prefetch = 0 : i64, scratch_operands = 0 : i64, tpu.core_type = #tpu.core_type<tc>, window_params = [{transform_indices = @transform_0, window_bounds = array<i64: 1>}, {transform_indices = @transform_1, window_bounds = array<i64: 2, 1024>}, {transform_indices = @transform_2, window_bounds = array<i64: 2, 1024>}]} {
    %c0 = arith.constant 0 : index
    %c0_0 = arith.constant 0 : index
    %0 = vector.load %arg2[%c0, %c0_0] : memref<2x1024xf32, #tpu.memory_space<vmem>>, vector<2x1024xf32>
    %c0_1 = arith.constant 0 : index
    %1 = memref.load %arg1[%c0_1] : memref<1xf32, #tpu.memory_space<smem>>
    %2 = vector.broadcast %1 : f32 to vector<2x1024xf32>
    %3 = arith.mulf %0, %2 : vector<2x1024xf32>
    %c0_2 = arith.constant 0 : index
    %c0_3 = arith.constant 0 : index
    %4 = vector.load %arg3[%c0_2, %c0_3] : memref<2x1024xf32, #tpu.memory_space<vmem>>, vector<2x1024xf32>
    tpu.vector_store %arg3[%c0_2, %c0_3], %3 {strides = array<i32>} : memref<2x1024xf32, #tpu.memory_space<vmem>>, vector<2x1024xf32>,
    return
  }
  func.func @transform_0(%arg0: i32) -> i32 {
    %c0_i32 = arith.constant 0 : i32
    %c0_i32_0 = arith.constant 0 : i32
    return %c0_i32 : i32
  }
  func.func @transform_1(%arg0: i32) -> (i32, i32) {
    %c0_i32 = arith.constant 0 : i32
    %c0_i32_0 = arith.constant 0 : i32
    return %arg0, %c0_i32 : i32, i32
  }
  func.func @transform_2(%arg0: i32) -> (i32, i32) {
    %c0_i32 = arith.constant 0 : i32
    %c0_i32_0 = arith.constant 0 : i32
    return %arg0, %c0_i32 : i32, i32
  }
}

</mosaic_0001>

<llo_original>
// kernel: tpu_custom_call.1
$region0: #{tpu_custom_call.1}
  #allocation0 [shape = 'u32[]', space=smem, size = 0x4, offset = 0x4, fixed_abs, tag = 'smem constant byte address 0x4 - core index']
  #allocation1 [shape = 'u32[144,128]{1,0:T(1,128)}', space=vmem, size = 0x12000, scoped, tag = 'internal scratch']
  #allocation2 [shape = 'f32[1]{0:T(128)S(6)}', space=smem, size = 0x200, scoped, tag = 'scoped memory for tpu_custom_call.1']
  %s0 = inlined_call_operand.<no memory space> [shape: f32[1], index: 0, kind: input, shape index: {}]
  %s1 = inlined_call_operand.hbm [shape: f32[2,1024], index: 1, kind: input, shape index: {}]
  %s2 = inlined_call_operand.hbm [shape: f32[2,1024], index: 2, kind: output, shape index: {}]
  %s3 = sld [smem:[#allocation0]]
  $region22: #{tpu_custom_call.1} parent=0
    _
  %s5 = ssub.s32 1, %s3
  %s6 = scalar_select 0, %s5, %s3
  %7 = sst [smem:[#allocation2]] %s0
  $region1: #{tpu_custom_call.1} parent=0
    #allocation3 [shape = 'u8[8192]{0}', space=vmem, size = 0x2000, scoped, tag = 'input window, operand 1, single buffered']
    #allocation4 [shape = 's32[1]{0}', space=sflag, size = 0x4, scoped, tag = 'scoped memory for tpu_custom_call.1']
    #allocation5 [shape = 's32[1]{0}', space=sflag, size = 0x4, scoped, tag = 'scoped memory for tpu_custom_call.1']
    #allocation6 [shape = 'u8[8192]{0}', space=vmem, size = 0x2000, scoped, tag = 'output window, operand 0, single buffered']
    %8 = vsyncpa [#allocation4], 0
    %9 = vsyncpa [#allocation5], 0
    // Predicated region
    $region2: #{tpu_custom_call.1} parent=1 // pred_check
      _
    $region3: #{tpu_custom_call.1} parent=1 // pred_check_branch
      %11 = sbr.rel (0) target = $region5
    $region4: #{tpu_custom_call.1} parent=1 // pred_region
      _
    $region5: #{tpu_custom_call.1} parent=1 // pred_fallthru
      _
    // Predicated region
    $region6: #{tpu_custom_call.1} parent=1 // pred_check
      _
    $region7: #{tpu_custom_call.1} parent=1 // pred_check_branch
      %13 = sbr.rel (0) target = $region9
    $region8: #{tpu_custom_call.1} parent=1 // pred_region
      %s15 = ssub.s32 256, 256
      %16 = vsyncadd [#allocation4], %s15
      %s18 = sshll.u32 [#allocation3], 4
      %s19 = int_to_ptr.vmem [resolvable:$true] %s18
      %21 = dma.hbm_to_vmem [thread:$0]  %s1, 256, %s19, [#allocation4]
    $region9: #{tpu_custom_call.1} parent=1 // pred_fallthru
      _
    // Predicated region
    $region10: #{tpu_custom_call.1} parent=1 // pred_check
      _
    $region11: #{tpu_custom_call.1} parent=1 // pred_check_branch
      %23 = sbr.rel (0) target = $region13
    $region12: #{tpu_custom_call.1} parent=1 // pred_region
      %24 = dma.done [#allocation4], 256
    $region13: #{tpu_custom_call.1} parent=1 // pred_fallthru
      _
    %v25 = vld [vmem:[#allocation3] sm:$0xff]
    %v26 = vld [vmem:[#allocation3 + $0x8] sm:$0xff]
    %s27 = sld [smem:[#allocation2]]
    %v28 = vstv %s27
    %v29 = vmul.f32 %v25, %v28
    %v30 = vmul.f32 %v26, %v28
    %31 = vst [vmem:[#allocation6] sm:$0xff] %v29
    %32 = vst [vmem:[#allocation6 + $0x8] sm:$0xff] %v30
    // Predicated region
    $region14: #{tpu_custom_call.1} parent=1 // pred_check
      _
    $region15: #{tpu_custom_call.1} parent=1 // pred_check_branch
      %34 = sbr.rel (0) target = $region17
    $region16: #{tpu_custom_call.1} parent=1 // pred_region
      %s36 = ssub.s32 256, 256
      %37 = vsyncadd [#allocation5], %s36
      %s39 = sshll.u32 [#allocation6], 4
      %s40 = int_to_ptr.vmem [resolvable:$true] %s39
      %42 = dma.vmem_to_hbm [thread:$0]  %s40, 256, %s2, [#allocation5]
    $region17: #{tpu_custom_call.1} parent=1 // pred_fallthru
      _
    // Predicated region
    $region18: #{tpu_custom_call.1} parent=1 // pred_check
      _
    $region19: #{tpu_custom_call.1} parent=1 // pred_check_branch
      %44 = sbr.rel (0) target = $region21
    $region20: #{tpu_custom_call.1} parent=1 // pred_region
      %45 = dma.done [#allocation5], 256
    $region21: #{tpu_custom_call.1} parent=1 // pred_fallthru
      _
    %46 = vsyncpa [#allocation4], 1
    %47 = vsyncpa [#allocation5], 1

</llo_original>
